<compile_context>
chip_gen: v7x
topology: tpu7x:2x2x1
jax: 0.10.0
libtpu: 0.0.40
codegen_flags: <defaults>
</compile_context>

<pallas_src>
import functools

import jax
import jax.numpy as jnp
from jax.experimental import pallas as pl
from jax.experimental.pallas import tpu as pltpu

LANE = 128                   # lanes per packed row of the pair axis
MAX_ROWS_PER_STEP = 1024     # 1024 rows * 128 lanes = 131072 pairs per grid step
INKERNEL_LOOKUP_MAX = 32     # max n_types**2 for the in-kernel select-chain lookup


def _num_tensorcores():
    """Best-effort TensorCores-per-device detection (2 on v7x, else 1)."""
    try:
        kind = jax.devices()[0].device_kind.lower()
    except Exception:
        return 1
    return 2 if "v7" in kind else 1


_NUM_TC = _num_tensorcores()


def _round_up(x, m):
    return -(-x // m) * m


def _tiling(n_pairs, num_cores):
    """Return (rows_pad, rows_tile) for the packed (rows, 128) pair layout."""
    rows = -(-n_pairs // LANE)
    if rows <= 8:
        return rows, rows                         # single tiny block (full extent)
    rows8 = _round_up(rows, 8)
    if num_cores > 1:
        # Even grid so the two v7x TensorCores stay balanced.
        grid = num_cores * -(-rows8 // (num_cores * MAX_ROWS_PER_STEP))
    else:
        # Single TC (v5e/v6e): one tile when it fits, no forced split.
        if rows8 <= MAX_ROWS_PER_STEP:
            return rows8, rows8
        grid = -(-rows8 // MAX_ROWS_PER_STEP)
    # Tile derived from the grid -> total row padding < grid * 8.
    rows_tile = _round_up(-(-rows8 // grid), 8)
    rows_pad = grid * rows_tile
    return rows_pad, rows_tile


def _lj_store(dx, dy, dz, sig, eps, out_ref, calc_forces):
    """Shared LJ 12-6 math; writes energy (and forces) planes."""
    r2 = dx * dx + dy * dy + dz * dz
    inv_r = jax.lax.rsqrt(r2)                 # EUP; replaces sqrt + divides
    ratio = sig * inv_r                       # sig / r
    r3 = ratio * ratio * ratio
    p6 = r3 * r3                              # (sig/r)^6
    p12 = p6 * p6                             # (sig/r)^12
    energy = 4.0 * eps * (p12 - p6)
    if calc_forces:
        out_ref[0] = energy
        unit = (24.0 * eps) * (2.0 * p12 - p6) * (inv_r * inv_r)
        out_ref[1] = unit * dx
        out_ref[2] = unit * dy
        out_ref[3] = unit * dz
    else:
        out_ref[...] = energy


def _lj126_lookup_kernel(idx_ref, diff_ref, sig_ref, eps_ref, out_ref,
                         *, n2, calc_forces):
    # idx_ref : (T, 128) int32 flat type-pair index ti*n_types+tj   (VMEM)
    # diff_ref: (3, T, 128) f32 [dx, dy, dz]                        (VMEM)
    # sig_ref / eps_ref: (n2,) f32 flattened parameter tables       (SMEM)
    # out_ref : (4, T, 128) f32 [energy, fx, fy, fz] or (T, 128) energy-only
    dx = diff_ref[0]
    dy = diff_ref[1]
    dz = diff_ref[2]
    idx = idx_ref[...]
    # In-kernel table lookup via an unrolled select chain (pure VPU; kernel is
    # HBM-bound with large VPU slack, and n2 is small & static).
    sig = jnp.zeros_like(dx)
    eps = jnp.zeros_like(dx)
    for t in range(n2):
        m = idx == t
        sig = jnp.where(m, sig_ref[t], sig)
        eps = jnp.where(m, eps_ref[t], eps)
    _lj_store(dx, dy, dz, sig, eps, out_ref, calc_forces)


def _lj126_gathered_kernel(in_ref, out_ref, *, calc_forces):
    # Fallback for large type tables: sig/eps gathered per pair on the host.
    # in_ref : (5, T, 128) = [dx, dy, dz, sig, eps]
    _lj_store(in_ref[0], in_ref[1], in_ref[2], in_ref[3], in_ref[4],
              out_ref, calc_forces)


@functools.partial(jax.jit, static_argnames=("calc_forces",))
def lj126_forward(sig, eps, pair_i, pair_j, pair_diff, atom_types,
                  calc_forces=False):
    """JAX/Pallas equivalent of LJ126.forward.

    sig, eps:    (n_types, n_types) float32 parameter tables
    pair_i/j:    (P,) int32 atom indices of each pair
    pair_diff:   (P, 3) float32 displacement vectors
    atom_types:  (N,) int32 per-atom type indices
    """
    P = pair_diff.shape[0]
    n_types = sig.shape[0]
    n2 = n_types * n_types

    rows_pad, rows_tile = _tiling(P, _NUM_TC)
    p_pad = rows_pad * LANE
    pad = p_pad - P
    grid = (rows_pad // rows_tile,)

    ti = atom_types[pair_i].astype(jnp.int32)
    tj = atom_types[pair_j].astype(jnp.int32)
    diff = pair_diff.astype(jnp.float32)

    # TODO(synk): ideally the caller would provide pair_diff / the type index
    # already in the packed (planes, rows_pad, 128) layout; the (P, 3) module
    # API forces one HBM re-layout here and one forces transpose on the way out.

    if calc_forces:
        out_shape = jax.ShapeDtypeStruct((4, rows_pad, LANE), jnp.float32)
        out_spec = pl.BlockSpec((4, rows_tile, LANE), lambda i: (0, i, 0))
    else:
        # Energy-only variant: single output plane, skips the force math/stores.
        out_shape = jax.ShapeDtypeStruct((rows_pad, LANE), jnp.float32)
        out_spec = pl.BlockSpec((rows_tile, LANE), lambda i: (i, 0))

    cparams = pltpu.CompilerParams(dimension_semantics=("parallel",))

    if n2 <= INKERNEL_LOOKUP_MAX:
        # One int32 index plane + three f32 diff planes; tables go to SMEM.
        idx_slab = jnp.pad(ti * n_types + tj, (0, pad)).reshape(rows_pad, LANE)
        # Pad lanes with 1.0 (keeps r2 > 0); padded results are sliced off below.
        diff_slab = jnp.pad(diff.T, ((0, 0), (0, pad)),
                            constant_values=1.0).reshape(3, rows_pad, LANE)
        out = pl.pallas_call(
            functools.partial(_lj126_lookup_kernel, n2=n2,
                              calc_forces=calc_forces),
            out_shape=out_shape,
            grid=grid,
            in_specs=[
                pl.BlockSpec((rows_tile, LANE), lambda i: (i, 0)),
                pl.BlockSpec((3, rows_tile, LANE), lambda i: (0, i, 0)),
                pl.BlockSpec(memory_space=pltpu.MemorySpace.SMEM),
                pl.BlockSpec(memory_space=pltpu.MemorySpace.SMEM),
            ],
            out_specs=out_spec,
            compiler_params=cparams,
        )(idx_slab, diff_slab,
          sig.reshape(-1).astype(jnp.float32),
          eps.reshape(-1).astype(jnp.float32))
    else:
        # Large type table: gather per-pair sig/eps on the host side (old path).
        sig_pair = sig[ti, tj].astype(jnp.float32)
        eps_pair = eps[ti, tj].astype(jnp.float32)
        slab = jnp.stack(
            [diff[:, 0], diff[:, 1], diff[:, 2], sig_pair, eps_pair], axis=0)
        slab = jnp.pad(slab, ((0, 0), (0, pad)),
                       constant_values=1.0).reshape(5, rows_pad, LANE)
        out = pl.pallas_call(
            functools.partial(_lj126_gathered_kernel, calc_forces=calc_forces),
            out_shape=out_shape,
            grid=grid,
            in_specs=[pl.BlockSpec((5, rows_tile, LANE), lambda i: (0, i, 0))],
            out_specs=out_spec,
            compiler_params=cparams,
        )(slab)

    if calc_forces:
        flat = out.reshape(4, p_pad)
        energy = flat[0, :P]                          # (P,)
        forces = jnp.transpose(flat[1:4, :P])         # (P, 3), module layout
        return energy, forces
    return out.reshape(p_pad)[:P]


def _reference(sig, eps, pair_i, pair_j, pair_diff, atom_types):
    """Pure-JAX reference mirroring the PyTorch module."""
    pair_dist = jnp.linalg.norm(pair_diff, axis=-1)
    s = sig[atom_types[pair_i], atom_types[pair_j]]
    e = eps[atom_types[pair_i], atom_types[pair_j]]
    p6 = (s / pair_dist) ** 6
    p12 = jnp.square(p6)
    energy = 4.0 * e * (p12 - p6)
    unit = 24.0 * e * (2.0 * p12 - p6) / jnp.square(pair_dist)
    forces = unit[:, None] * pair_diff
    return energy, forces


def _run_case(key, n_atoms, n_types, n_pairs):
    k1, k2, k3, k4, k5, k6 = jax.random.split(key, 6)
    atom_types = jax.random.randint(k1, (n_atoms,), 0, n_types, dtype=jnp.int32)
    pair_i = jax.random.randint(k2, (n_pairs,), 0, n_atoms, dtype=jnp.int32)
    pair_j = jax.random.randint(k3, (n_pairs,), 0, n_atoms, dtype=jnp.int32)
    pair_diff = 0.5 + jnp.abs(
        jax.random.normal(k4, (n_pairs, 3), dtype=jnp.float32))
    # Parameter init matching reset_parameters: U(0.1, 1.0)
    sig = jax.random.uniform(k5, (n_types, n_types), jnp.float32, 0.1, 1.0)
    eps = jax.random.uniform(k6, (n_types, n_types), jnp.float32, 0.1, 1.0)

    energy, forces = lj126_forward(
        sig, eps, pair_i, pair_j, pair_diff, atom_types, calc_forces=True)
    energy_only = lj126_forward(
        sig, eps, pair_i, pair_j, pair_diff, atom_types, calc_forces=False)
    jax.block_until_ready((energy, forces, energy_only))

    ref_e, ref_f = _reference(sig, eps, pair_i, pair_j, pair_diff, atom_types)
    assert jnp.allclose(energy, ref_e, rtol=2e-5, atol=1e-5)
    assert jnp.allclose(energy_only, ref_e, rtol=2e-5, atol=1e-5)
    assert jnp.allclose(forces, ref_f, rtol=2e-5, atol=1e-5)


if __name__ == "__main__":
    key = jax.random.PRNGKey(0)
    ka, kb, kc = jax.random.split(key, 3)

    # Tiny case: single (rows<=8) block, in-kernel table lookup.
    _run_case(ka, n_atoms=8, n_types=3, n_pairs=20)
    # Multi-row case: row-padded grid, in-kernel lookup + energy-only variant.
    _run_case(kb, n_atoms=32, n_types=4, n_pairs=3000)
    # Large type table: host-side gather fallback path.
    _run_case(kc, n_atoms=64, n_types=8, n_pairs=1000)

    print("KERNEL_OK")
</pallas_src>

<mosaic_0001>
module attributes {stable_mosaic.version = 11 : i64} {
  func.func @_lj126_lookup_kernel(%arg0: i32, %arg1: memref<1x128xi32, #tpu.memory_space<vmem>>, %arg2: memref<3x1x128xf32, #tpu.memory_space<vmem>>, %arg3: memref<9xf32, #tpu.memory_space<smem>>, %arg4: memref<9xf32, #tpu.memory_space<smem>>, %arg5: memref<4x1x128xf32, #tpu.memory_space<vmem>>) attributes {dimension_semantics = [#tpu.dimension_semantics<parallel>], iteration_bounds = array<i64: 1>, scalar_prefetch = 0 : i64, scratch_operands = 0 : i64, tpu.core_type = #tpu.core_type<tc>, window_params = [{transform_indices = @transform_0, window_bounds = array<i64: 1, 128>}, {transform_indices = @transform_1, window_bounds = array<i64: 3, 1, 128>}, {transform_indices = @transform_2, window_bounds = array<i64: 9>}, {transform_indices = @transform_3, window_bounds = array<i64: 9>}, {transform_indices = @transform_4, window_bounds = array<i64: 4, 1, 128>}]} {
    %c0 = arith.constant 0 : index
    %c0_0 = arith.constant 0 : index
    %c0_1 = arith.constant 0 : index
    %0 = vector.load %arg2[%c0, %c0_0, %c0_1] : memref<3x1x128xf32, #tpu.memory_space<vmem>>, vector<1x1x128xf32>
    %1 = vector.shape_cast %0 : vector<1x1x128xf32> to vector<1x128xf32>
    %c1 = arith.constant 1 : index
    %c0_2 = arith.constant 0 : index
    %c0_3 = arith.constant 0 : index
    %2 = vector.load %arg2[%c1, %c0_2, %c0_3] : memref<3x1x128xf32, #tpu.memory_space<vmem>>, vector<1x1x128xf32>
    %3 = vector.shape_cast %2 : vector<1x1x128xf32> to vector<1x128xf32>
    %c2 = arith.constant 2 : index
    %c0_4 = arith.constant 0 : index
    %c0_5 = arith.constant 0 : index
    %4 = vector.load %arg2[%c2, %c0_4, %c0_5] : memref<3x1x128xf32, #tpu.memory_space<vmem>>, vector<1x1x128xf32>
    %5 = vector.shape_cast %4 : vector<1x1x128xf32> to vector<1x128xf32>
    %c0_6 = arith.constant 0 : index
    %c0_7 = arith.constant 0 : index
    %6 = vector.load %arg1[%c0_6, %c0_7] : memref<1x128xi32, #tpu.memory_space<vmem>>, vector<1x128xi32>
    %cst = arith.constant 0.000000e+00 : f32
    %7 = vector.broadcast %cst : f32 to vector<1x128xf32>
    %cst_8 = arith.constant 0.000000e+00 : f32
    %8 = vector.broadcast %cst_8 : f32 to vector<1x128xf32>
    %c0_i32 = arith.constant 0 : i32
    %9 = vector.broadcast %c0_i32 : i32 to vector<1x128xi32>
    %10 = arith.cmpi eq, %6, %9 : vector<1x128xi32>
    %c0_9 = arith.constant 0 : index
    %11 = memref.load %arg3[%c0_9] : memref<9xf32, #tpu.memory_space<smem>>
    %12 = vector.broadcast %11 : f32 to vector<1x128xf32>
    %13 = arith.select %10, %12, %7 : vector<1x128xi1>, vector<1x128xf32>
    %c0_10 = arith.constant 0 : index
    %14 = memref.load %arg4[%c0_10] : memref<9xf32, #tpu.memory_space<smem>>
    %15 = vector.broadcast %14 : f32 to vector<1x128xf32>
    %16 = arith.select %10, %15, %8 : vector<1x128xi1>, vector<1x128xf32>
    %c1_i32 = arith.constant 1 : i32
    %17 = vector.broadcast %c1_i32 : i32 to vector<1x128xi32>
    %18 = arith.cmpi eq, %6, %17 : vector<1x128xi32>
    %c1_11 = arith.constant 1 : index
    %19 = memref.load %arg3[%c1_11] : memref<9xf32, #tpu.memory_space<smem>>
    %20 = vector.broadcast %19 : f32 to vector<1x128xf32>
    %21 = arith.select %18, %20, %13 : vector<1x128xi1>, vector<1x128xf32>
    %c1_12 = arith.constant 1 : index
    %22 = memref.load %arg4[%c1_12] : memref<9xf32, #tpu.memory_space<smem>>
    %23 = vector.broadcast %22 : f32 to vector<1x128xf32>
    %24 = arith.select %18, %23, %16 : vector<1x128xi1>, vector<1x128xf32>
    %c2_i32 = arith.constant 2 : i32
    %25 = vector.broadcast %c2_i32 : i32 to vector<1x128xi32>
    %26 = arith.cmpi eq, %6, %25 : vector<1x128xi32>
    %c2_13 = arith.constant 2 : index
    %27 = memref.load %arg3[%c2_13] : memref<9xf32, #tpu.memory_space<smem>>
    %28 = vector.broadcast %27 : f32 to vector<1x128xf32>
    %29 = arith.select %26, %28, %21 : vector<1x128xi1>, vector<1x128xf32>
    %c2_14 = arith.constant 2 : index
    %30 = memref.load %arg4[%c2_14] : memref<9xf32, #tpu.memory_space<smem>>
    %31 = vector.broadcast %30 : f32 to vector<1x128xf32>
    %32 = arith.select %26, %31, %24 : vector<1x128xi1>, vector<1x128xf32>
    %c3_i32 = arith.constant 3 : i32
    %33 = vector.broadcast %c3_i32 : i32 to vector<1x128xi32>
    %34 = arith.cmpi eq, %6, %33 : vector<1x128xi32>
    %c3 = arith.constant 3 : index
    %35 = memref.load %arg3[%c3] : memref<9xf32, #tpu.memory_space<smem>>
    %36 = vector.broadcast %35 : f32 to vector<1x128xf32>
    %37 = arith.select %34, %36, %29 : vector<1x128xi1>, vector<1x128xf32>
    %c3_15 = arith.constant 3 : index
    %38 = memref.load %arg4[%c3_15] : memref<9xf32, #tpu.memory_space<smem>>
    %39 = vector.broadcast %38 : f32 to vector<1x128xf32>
    %40 = arith.select %34, %39, %32 : vector<1x128xi1>, vector<1x128xf32>
    %c4_i32 = arith.constant 4 : i32
    %41 = vector.broadcast %c4_i32 : i32 to vector<1x128xi32>
    %42 = arith.cmpi eq, %6, %41 : vector<1x128xi32>
    %c4 = arith.constant 4 : index
    %43 = memref.load %arg3[%c4] : memref<9xf32, #tpu.memory_space<smem>>
    %44 = vector.broadcast %43 : f32 to vector<1x128xf32>
    %45 = arith.select %42, %44, %37 : vector<1x128xi1>, vector<1x128xf32>
    %c4_16 = arith.constant 4 : index
    %46 = memref.load %arg4[%c4_16] : memref<9xf32, #tpu.memory_space<smem>>
    %47 = vector.broadcast %46 : f32 to vector<1x128xf32>
    %48 = arith.select %42, %47, %40 : vector<1x128xi1>, vector<1x128xf32>
    %c5_i32 = arith.constant 5 : i32
    %49 = vector.broadcast %c5_i32 : i32 to vector<1x128xi32>
    %50 = arith.cmpi eq, %6, %49 : vector<1x128xi32>
    %c5 = arith.constant 5 : index
    %51 = memref.load %arg3[%c5] : memref<9xf32, #tpu.memory_space<smem>>
    %52 = vector.broadcast %51 : f32 to vector<1x128xf32>
    %53 = arith.select %50, %52, %45 : vector<1x128xi1>, vector<1x128xf32>
    %c5_17 = arith.constant 5 : index
    %54 = memref.load %arg4[%c5_17] : memref<9xf32, #tpu.memory_space<smem>>
    %55 = vector.broadcast %54 : f32 to vector<1x128xf32>
    %56 = arith.select %50, %55, %48 : vector<1x128xi1>, vector<1x128xf32>
    %c6_i32 = arith.constant 6 : i32
    %57 = vector.broadcast %c6_i32 : i32 to vector<1x128xi32>
    %58 = arith.cmpi eq, %6, %57 : vector<1x128xi32>
    %c6 = arith.constant 6 : index
    %59 = memref.load %arg3[%c6] : memref<9xf32, #tpu.memory_space<smem>>
    %60 = vector.broadcast %59 : f32 to vector<1x128xf32>
    %61 = arith.select %58, %60, %53 : vector<1x128xi1>, vector<1x128xf32>
    %c6_18 = arith.constant 6 : index
    %62 = memref.load %arg4[%c6_18] : memref<9xf32, #tpu.memory_space<smem>>
    %63 = vector.broadcast %62 : f32 to vector<1x128xf32>
    %64 = arith.select %58, %63, %56 : vector<1x128xi1>, vector<1x128xf32>
    %c7_i32 = arith.constant 7 : i32
    %65 = vector.broadcast %c7_i32 : i32 to vector<1x128xi32>
    %66 = arith.cmpi eq, %6, %65 : vector<1x128xi32>
    %c7 = arith.constant 7 : index
    %67 = memref.load %arg3[%c7] : memref<9xf32, #tpu.memory_space<smem>>
    %68 = vector.broadcast %67 : f32 to vector<1x128xf32>
    %69 = arith.select %66, %68, %61 : vector<1x128xi1>, vector<1x128xf32>
    %c7_19 = arith.constant 7 : index
    %70 = memref.load %arg4[%c7_19] : memref<9xf32, #tpu.memory_space<smem>>
    %71 = vector.broadcast %70 : f32 to vector<1x128xf32>
    %72 = arith.select %66, %71, %64 : vector<1x128xi1>, vector<1x128xf32>
    %c8_i32 = arith.constant 8 : i32
    %73 = vector.broadcast %c8_i32 : i32 to vector<1x128xi32>
    %74 = arith.cmpi eq, %6, %73 : vector<1x128xi32>
    %c8 = arith.constant 8 : index
    %75 = memref.load %arg3[%c8] : memref<9xf32, #tpu.memory_space<smem>>
    %76 = vector.broadcast %75 : f32 to vector<1x128xf32>
    %77 = arith.select %74, %76, %69 : vector<1x128xi1>, vector<1x128xf32>
    %c8_20 = arith.constant 8 : index
    %78 = memref.load %arg4[%c8_20] : memref<9xf32, #tpu.memory_space<smem>>
    %79 = vector.broadcast %78 : f32 to vector<1x128xf32>
    %80 = arith.select %74, %79, %72 : vector<1x128xi1>, vector<1x128xf32>
    %81 = arith.mulf %1, %1 : vector<1x128xf32>
    %82 = arith.mulf %3, %3 : vector<1x128xf32>
    %83 = arith.addf %81, %82 : vector<1x128xf32>
    %84 = arith.mulf %5, %5 : vector<1x128xf32>
    %85 = arith.addf %83, %84 : vector<1x128xf32>
    %86 = math.rsqrt %85 : vector<1x128xf32>
    %87 = arith.mulf %77, %86 : vector<1x128xf32>
    %88 = arith.mulf %87, %87 : vector<1x128xf32>
    %89 = arith.mulf %88, %87 : vector<1x128xf32>
    %90 = arith.mulf %89, %89 : vector<1x128xf32>
    %91 = arith.mulf %90, %90 : vector<1x128xf32>
    %cst_21 = arith.constant 4.000000e+00 : f32
    %92 = vector.broadcast %cst_21 : f32 to vector<1x128xf32>
    %93 = arith.mulf %92, %80 : vector<1x128xf32>
    %94 = arith.subf %91, %90 : vector<1x128xf32>
    %95 = arith.mulf %93, %94 : vector<1x128xf32>
    %c0_22 = arith.constant 0 : index
    %c0_23 = arith.constant 0 : index
    %c0_24 = arith.constant 0 : index
    %96 = vector.load %arg5[%c0_22, %c0_23, %c0_24] : memref<4x1x128xf32, #tpu.memory_space<vmem>>, vector<1x1x128xf32>
    %97 = vector.shape_cast %96 : vector<1x1x128xf32> to vector<1x128xf32>
    %98 = vector.shape_cast %95 : vector<1x128xf32> to vector<1x1x128xf32>
    tpu.vector_store %arg5[%c0_22, %c0_23, %c0_24], %98 {strides = array<i32>} : memref<4x1x128xf32, #tpu.memory_space<vmem>>, vector<1x1x128xf32>,
    %cst_25 = arith.constant 2.400000e+01 : f32
    %99 = vector.broadcast %cst_25 : f32 to vector<1x128xf32>
    %100 = arith.mulf %99, %80 : vector<1x128xf32>
    %cst_26 = arith.constant 2.000000e+00 : f32
    %101 = vector.broadcast %cst_26 : f32 to vector<1x128xf32>
    %102 = arith.mulf %101, %91 : vector<1x128xf32>
    %103 = arith.subf %102, %90 : vector<1x128xf32>
    %104 = arith.mulf %100, %103 : vector<1x128xf32>
    %105 = arith.mulf %86, %86 : vector<1x128xf32>
    %106 = arith.mulf %104, %105 : vector<1x128xf32>
    %107 = arith.mulf %106, %1 : vector<1x128xf32>
    %c1_27 = arith.constant 1 : index
    %c0_28 = arith.constant 0 : index
    %c0_29 = arith.constant 0 : index
    %108 = vector.load %arg5[%c1_27, %c0_28, %c0_29] : memref<4x1x128xf32, #tpu.memory_space<vmem>>, vector<1x1x128xf32>
    %109 = vector.shape_cast %108 : vector<1x1x128xf32> to vector<1x128xf32>
    %110 = vector.shape_cast %107 : vector<1x128xf32> to vector<1x1x128xf32>
    tpu.vector_store %arg5[%c1_27, %c0_28, %c0_29], %110 {strides = array<i32>} : memref<4x1x128xf32, #tpu.memory_space<vmem>>, vector<1x1x128xf32>,
    %111 = arith.mulf %106, %3 : vector<1x128xf32>
    %c2_30 = arith.constant 2 : index
    %c0_31 = arith.constant 0 : index
    %c0_32 = arith.constant 0 : index
    %112 = vector.load %arg5[%c2_30, %c0_31, %c0_32] : memref<4x1x128xf32, #tpu.memory_space<vmem>>, vector<1x1x128xf32>
    %113 = vector.shape_cast %112 : vector<1x1x128xf32> to vector<1x128xf32>
    %114 = vector.shape_cast %111 : vector<1x128xf32> to vector<1x1x128xf32>
    tpu.vector_store %arg5[%c2_30, %c0_31, %c0_32], %114 {strides = array<i32>} : memref<4x1x128xf32, #tpu.memory_space<vmem>>, vector<1x1x128xf32>,
    %115 = arith.mulf %106, %5 : vector<1x128xf32>
    %c3_33 = arith.constant 3 : index
    %c0_34 = arith.constant 0 : index
    %c0_35 = arith.constant 0 : index
    %116 = vector.load %arg5[%c3_33, %c0_34, %c0_35] : memref<4x1x128xf32, #tpu.memory_space<vmem>>, vector<1x1x128xf32>
    %117 = vector.shape_cast %116 : vector<1x1x128xf32> to vector<1x128xf32>
    %118 = vector.shape_cast %115 : vector<1x128xf32> to vector<1x1x128xf32>
    tpu.vector_store %arg5[%c3_33, %c0_34, %c0_35], %118 {strides = array<i32>} : memref<4x1x128xf32, #tpu.memory_space<vmem>>, vector<1x1x128xf32>,
    return
  }
  func.func @transform_0(%arg0: i32) -> (i32, i32) {
    %c0_i32 = arith.constant 0 : i32
    %c0_i32_0 = arith.constant 0 : i32
    return %arg0, %c0_i32 : i32, i32
  }
  func.func @transform_1(%arg0: i32) -> (i32, i32, i32) {
    %c0_i32 = arith.constant 0 : i32
    %c0_i32_0 = arith.constant 0 : i32
    %c0_i32_1 = arith.constant 0 : i32
    return %c0_i32, %arg0, %c0_i32_0 : i32, i32, i32
  }
  func.func @transform_2(%arg0: i32) -> i32 {
    %c0_i32 = arith.constant 0 : i32
    %c0_i32_0 = arith.constant 0 : i32
    return %c0_i32 : i32
  }
  func.func @transform_3(%arg0: i32) -> i32 {
    %c0_i32 = arith.constant 0 : i32
    %c0_i32_0 = arith.constant 0 : i32
    return %c0_i32 : i32
  }
  func.func @transform_4(%arg0: i32) -> (i32, i32, i32) {
    %c0_i32 = arith.constant 0 : i32
    %c0_i32_0 = arith.constant 0 : i32
    %c0_i32_1 = arith.constant 0 : i32
    return %c0_i32, %arg0, %c0_i32_0 : i32, i32, i32
  }
}

</mosaic_0001>

<llo_original>
// kernel: lj126_forward.1
$region0: #{lj126_forward.1}
  #allocation0 [shape = 'u32[]', space=smem, size = 0x4, offset = 0x4, fixed_abs, tag = 'smem constant byte address 0x4 - core index']
  #allocation1 [shape = 'u32[144,128]{1,0:T(1,128)}', space=vmem, size = 0x12000, scoped, tag = 'internal scratch']
  %s0 = inlined_call_operand.vmem [shape: s32[1,128], index: 0, kind: input, shape index: {}]
  %s1 = inlined_call_operand.vmem [shape: f32[3,1,128], index: 1, kind: input, shape index: {}]
  %s2 = inlined_call_operand.vmem [shape: f32[9], index: 2, kind: input, shape index: {}]
  %s3 = inlined_call_operand.vmem [shape: f32[9], index: 3, kind: input, shape index: {}]
  %s4 = inlined_call_operand.vmem [shape: f32[4,1,128], index: 4, kind: output, shape index: {}]
  %s5 = sld [smem:[#allocation0]]
  $region34: #{lj126_forward.1} parent=0
    _
  %s7 = ssub.s32 1, %s5
  %s8 = scalar_select 0, %s7, %s5
  $region1: #{lj126_forward.1} parent=0
    #allocation2 [shape = 'u8[512]{0}', space=smem, size = 0x200, scoped, tag = 'input window, operand 2, single buffered']
    #allocation3 [shape = 's32[1]{0}', space=sflag, size = 0x4, scoped, tag = 'scoped memory for lj126_forward.1']
    #allocation4 [shape = 'u8[512]{0}', space=smem, size = 0x200, scoped, tag = 'input window, operand 3, single buffered']
    #allocation5 [shape = 's32[1]{0}', space=sflag, size = 0x4, scoped, tag = 'scoped memory for lj126_forward.1']
    %9 = vsyncpa [#allocation3], 0
    %10 = vsyncpa [#allocation5], 0
    // Predicated region
    $region2: #{lj126_forward.1} parent=1 // pred_check
      _
    $region3: #{lj126_forward.1} parent=1 // pred_check_branch
      %12 = sbr.rel (0) target = $region5
    $region4: #{lj126_forward.1} parent=1 // pred_region
      _
    $region5: #{lj126_forward.1} parent=1 // pred_fallthru
      _
    // Predicated region
    $region6: #{lj126_forward.1} parent=1 // pred_check
      _
    $region7: #{lj126_forward.1} parent=1 // pred_check_branch
      %14 = sbr.rel (0) target = $region9
    $region8: #{lj126_forward.1} parent=1 // pred_region
      _
    $region9: #{lj126_forward.1} parent=1 // pred_fallthru
      _
    // Predicated region
    $region10: #{lj126_forward.1} parent=1 // pred_check
      _
    $region11: #{lj126_forward.1} parent=1 // pred_check_branch
      %16 = sbr.rel (0) target = $region13
    $region12: #{lj126_forward.1} parent=1 // pred_region
      %s18 = ssub.s32 16, 16
      %19 = vsyncadd [#allocation3], %s18
      %s21 = sshll.u32 %s2, 4
      %s22 = int_to_ptr.vmem [resolvable:$true] %s21
      %24 = dma.vmem_to_smem %s22, 16, [#allocation2], [#allocation3]
    $region13: #{lj126_forward.1} parent=1 // pred_fallthru
      _
    // Predicated region
    $region14: #{lj126_forward.1} parent=1 // pred_check
      _
    $region15: #{lj126_forward.1} parent=1 // pred_check_branch
      %26 = sbr.rel (0) target = $region17
    $region16: #{lj126_forward.1} parent=1 // pred_region
      %s28 = ssub.s32 16, 16
      %29 = vsyncadd [#allocation5], %s28
      %s31 = sshll.u32 %s3, 4
      %s32 = int_to_ptr.vmem [resolvable:$true] %s31
      %34 = dma.vmem_to_smem %s32, 16, [#allocation4], [#allocation5]
    $region17: #{lj126_forward.1} parent=1 // pred_fallthru
      _
    // Predicated region
    $region18: #{lj126_forward.1} parent=1 // pred_check
      _
    $region19: #{lj126_forward.1} parent=1 // pred_check_branch
      %36 = sbr.rel (0) target = $region21
    $region20: #{lj126_forward.1} parent=1 // pred_region
      %37 = dma.done [#allocation3], 16
    $region21: #{lj126_forward.1} parent=1 // pred_fallthru
      _
    // Predicated region
    $region22: #{lj126_forward.1} parent=1 // pred_check
      _
    $region23: #{lj126_forward.1} parent=1 // pred_check_branch
      %39 = sbr.rel (0) target = $region25
    $region24: #{lj126_forward.1} parent=1 // pred_region
      %40 = dma.done [#allocation5], 16
    $region25: #{lj126_forward.1} parent=1 // pred_fallthru
      _
    %41 = sfence
    %v42 = vld [vmem:[%s1] sm:$0x1]
    %s43 = scalar_lea.vmem %s1, 1
    %v44 = vld [vmem:[%s43] sm:$0x1]
    %s45 = scalar_lea.vmem %s1, 2
    %v46 = vld [vmem:[%s45] sm:$0x1]
    %v47 = vld [vmem:[%s0] sm:$0x1]
    %vm48 = vcmp.eq.s32.totalorder %v47, 0
    %s49 = sld [smem:[#allocation2]]
    %v50 = vstv %s49
    %v51 = vsel %vm48, %v50, 0.0
    %s52 = sld [smem:[#allocation4]]
    %v53 = vstv %s52
    %v54 = vsel %vm48, %v53, 0.0
    %vm55 = vcmp.eq.s32.totalorder %v47, 1
    %s56 = sld [smem:[#allocation2 + $0x1]]
    %v57 = vstv %s56
    %v58 = vsel %vm55, %v57, %v51
    %s59 = sld [smem:[#allocation4 + $0x1]]
    %v60 = vstv %s59
    %v61 = vsel %vm55, %v60, %v54
    %vm62 = vcmp.eq.s32.totalorder %v47, 2
    %s63 = sld [smem:[#allocation2 + $0x2]]
    %v64 = vstv %s63
    %v65 = vsel %vm62, %v64, %v58
    %s66 = sld [smem:[#allocation4 + $0x2]]
    %v67 = vstv %s66
    %v68 = vsel %vm62, %v67, %v61
    %vm69 = vcmp.eq.s32.totalorder %v47, 3
    %s70 = sld [smem:[#allocation2 + $0x3]]
    %v71 = vstv %s70
    %v72 = vsel %vm69, %v71, %v65
    %s73 = sld [smem:[#allocation4 + $0x3]]
    %v74 = vstv %s73
    %v75 = vsel %vm69, %v74, %v68
    %vm76 = vcmp.eq.s32.totalorder %v47, 4
    %s77 = sld [smem:[#allocation2 + $0x4]]
    %v78 = vstv %s77
    %v79 = vsel %vm76, %v78, %v72
    %s80 = sld [smem:[#allocation4 + $0x4]]
    %v81 = vstv %s80
    %v82 = vsel %vm76, %v81, %v75
    %vm83 = vcmp.eq.s32.totalorder %v47, 5
    %s84 = sld [smem:[#allocation2 + $0x5]]
    %v85 = vstv %s84
    %v86 = vsel %vm83, %v85, %v79
    %s87 = sld [smem:[#allocation4 + $0x5]]
    %v88 = vstv %s87
    %v89 = vsel %vm83, %v88, %v82
    %vm90 = vcmp.eq.s32.totalorder %v47, 6
    %s91 = sld [smem:[#allocation2 + $0x6]]
    %v92 = vstv %s91
    %v93 = vsel %vm90, %v92, %v86
    %s94 = sld [smem:[#allocation4 + $0x6]]
    %v95 = vstv %s94
    %v96 = vsel %vm90, %v95, %v89
    %vm97 = vcmp.eq.s32.totalorder %v47, 7
    %s98 = sld [smem:[#allocation2 + $0x7]]
    %v99 = vstv %s98
    %v100 = vsel %vm97, %v99, %v93
    %s101 = sld [smem:[#allocation4 + $0x7]]
    %v102 = vstv %s101
    %v103 = vsel %vm97, %v102, %v96
    %vm104 = vcmp.eq.s32.totalorder %v47, 8
    %s105 = sld [smem:[#allocation2 + $0x8]]
    %v106 = vstv %s105
    %v107 = vsel %vm104, %v106, %v100
    %s108 = sld [smem:[#allocation4 + $0x8]]
    %v109 = vstv %s108
    %v110 = vsel %vm104, %v109, %v103
    %v111 = vmul.f32 %v42, %v42
    %v112 = vmul.f32 %v44, %v44
    %v113 = vadd.f32 %v111, %v112
    %v114 = vmul.f32 %v46, %v46
    %v115 = vadd.f32 %v113, %v114
    %v116 = vrsqrt.pop %v115
    %v117 = vmul.f32 %v107, %v116
    %v118 = vmul.f32 %v117, %v117
    %v119 = vmul.f32 %v118, %v117
    %v120 = vmul.f32 %v119, %v119
    %v121 = vmul.f32 %v120, %v120
    %v122 = vmul.f32 %v110, 4.0
    %v123 = vsub.f32 %v121, %v120
    %v124 = vmul.f32 %v122, %v123
    %125 = vst [vmem:[%s4] sm:$0x1] %v124
    %v126 = vmul.f32 %v110, 24.0
    %v127 = vmul.f32 %v121, 2.0
    %v128 = vsub.f32 %v127, %v120
    %v129 = vmul.f32 %v126, %v128
    %v130 = vmul.f32 %v116, %v116
    %v131 = vmul.f32 %v129, %v130
    %v132 = vmul.f32 %v131, %v42
    %s133 = scalar_lea.vmem %s4, 1
    %134 = vst [vmem:[%s133] sm:$0x1] %v132
    %v135 = vmul.f32 %v131, %v44
    %s136 = scalar_lea.vmem %s4, 2
    %137 = vst [vmem:[%s136] sm:$0x1] %v135
    %v138 = vmul.f32 %v131, %v46
    %s139 = scalar_lea.vmem %s4, 3
    %140 = vst [vmem:[%s139] sm:$0x1] %v138
    // Predicated region
    $region26: #{lj126_forward.1} parent=1 // pred_check
      _
    $region27: #{lj126_forward.1} parent=1 // pred_check_branch
      %142 = sbr.rel (0) target = $region29
    $region28: #{lj126_forward.1} parent=1 // pred_region
      _
    $region29: #{lj126_forward.1} parent=1 // pred_fallthru
      _
    // Predicated region
    $region30: #{lj126_forward.1} parent=1 // pred_check
      _
    $region31: #{lj126_forward.1} parent=1 // pred_check_branch
      %144 = sbr.rel (0) target = $region33
    $region32: #{lj126_forward.1} parent=1 // pred_region
      _
    $region33: #{lj126_forward.1} parent=1 // pred_fallthru
      _
    %145 = vsyncpa [#allocation3], 1
    %146 = vsyncpa [#allocation5], 1

</llo_original>
